<compile_context>
chip_gen: v7x
topology: tpu7x:2x2x1
jax: 0.10.0
libtpu: 0.0.40
codegen_flags: <defaults>
</compile_context>

<pallas_src>
import functools
import jax
import jax.numpy as jnp
from jax.experimental import pallas as pl
from jax.experimental.pallas import tpu as pltpu


# ----------------------------------------------------------------------------
# Pallas kernels
# ----------------------------------------------------------------------------
def _linear_kernel(x_ref, w_ref, b_ref, o_ref, *, act):
    """One M-tile of y = x @ w + b (optional ReLU). bf16 operands, f32 accum."""
    y = jnp.dot(x_ref[...], w_ref[...], preferred_element_type=jnp.float32)
    y = y + b_ref[...]
    if act == "relu":
        y = jnp.maximum(y, 0.0)
    o_ref[...] = y.astype(o_ref.dtype)


def linear_pallas(x, w, b, act=None, out_dtype=jnp.float32, tile_m=1024):
    """x: (M, K) @ w: (K, N) + b: (N,).  Tiled over M ("parallel"), weights
    resident.  No jnp.pad copy: grid = cdiv(M, tm); a partial boundary tile is
    masked by Pallas, and when M fits one tile the block equals the full dim."""
    M, K = x.shape
    N = w.shape[1]
    tm = M if M <= tile_m else tile_m
    return pl.pallas_call(
        functools.partial(_linear_kernel, act=act),
        out_shape=jax.ShapeDtypeStruct((M, N), out_dtype),
        grid_spec=pltpu.PrefetchScalarGridSpec(
            num_scalar_prefetch=0,
            grid=(pl.cdiv(M, tm),),
            in_specs=[
                pl.BlockSpec((tm, K), lambda i: (i, 0)),
                pl.BlockSpec((K, N), lambda i: (0, 0)),
                pl.BlockSpec((1, N), lambda i: (0, 0)),
            ],
            out_specs=pl.BlockSpec((tm, N), lambda i: (i, 0)),
        ),
        compiler_params=pltpu.CompilerParams(
            dimension_semantics=("parallel",)),
    )(x, w, b.reshape(1, N).astype(jnp.float32))


def _linear_t_kernel(x_ref, w_ref, b_ref, o_ref, *, act):
    """Lane-dense tile of Y^T = W @ X^T + b: (N, K) @ (K, tm) -> (N, tm)."""
    y = jnp.dot(w_ref[...], x_ref[...], preferred_element_type=jnp.float32)
    y = y + b_ref[...]
    if act == "relu":
        y = jnp.maximum(y, 0.0)
    o_ref[...] = y.astype(o_ref.dtype)


def linear_t_pallas(xT, w, b, act=None, out_dtype=jnp.float32, tile_m=1024):
    """xT: (K, M), w: (N, K), b: (N,) -> (N, M).

    Output last dim is the big M (spatial*batch positions), so stores are
    lane-dense unmasked vst's instead of N=16/32-wide masked partial stores,
    and the MXU output columns are fully used."""
    K, M = xT.shape
    N = w.shape[0]
    tm = M if M <= tile_m else tile_m
    return pl.pallas_call(
        functools.partial(_linear_t_kernel, act=act),
        out_shape=jax.ShapeDtypeStruct((N, M), out_dtype),
        grid_spec=pltpu.PrefetchScalarGridSpec(
            num_scalar_prefetch=0,
            grid=(pl.cdiv(M, tm),),
            in_specs=[
                pl.BlockSpec((K, tm), lambda i: (0, i)),
                pl.BlockSpec((N, K), lambda i: (0, 0)),
                pl.BlockSpec((N, 1), lambda i: (0, 0)),
            ],
            out_specs=pl.BlockSpec((N, tm), lambda i: (0, i)),
        ),
        compiler_params=pltpu.CompilerParams(
            dimension_semantics=("parallel",)),
    )(xT, w, b.reshape(N, 1).astype(jnp.float32))


def _mlp_kernel(*refs, acts):
    """Fused MLP head: refs = (x, w0, b0, w1, b1, ..., out)."""
    x_ref, out_ref = refs[0], refs[-1]
    wbs = refs[1:-1]
    y = x_ref[...]
    for li, act in enumerate(acts):
        w = wbs[2 * li][...]
        bb = wbs[2 * li + 1][...]
        y = jnp.dot(y.astype(jnp.bfloat16), w,
                    preferred_element_type=jnp.float32) + bb
        if act == "relu":
            y = jnp.maximum(y, 0.0)
    out_ref[...] = y.astype(out_ref.dtype)


def mlp_pallas(x, layers, tile_m=1024):
    """x: (M, K) bf16; layers: [(w bf16, b f32, act), ...] -> (M, n_out) f32."""
    M, K = x.shape
    N = layers[-1][0].shape[1]
    acts = tuple(act for _, _, act in layers)
    tm = M if M <= tile_m else tile_m
    args = [x]
    in_specs = [pl.BlockSpec((tm, K), lambda i: (i, 0))]
    for w, bb, _ in layers:
        args.append(w)
        in_specs.append(pl.BlockSpec(tuple(w.shape), lambda i: (0, 0)))
        args.append(bb.reshape(1, -1).astype(jnp.float32))
        in_specs.append(pl.BlockSpec((1, bb.shape[-1]), lambda i: (0, 0)))
    return pl.pallas_call(
        functools.partial(_mlp_kernel, acts=acts),
        out_shape=jax.ShapeDtypeStruct((M, N), jnp.float32),
        grid_spec=pltpu.PrefetchScalarGridSpec(
            num_scalar_prefetch=0,
            grid=(pl.cdiv(M, tm),),
            in_specs=in_specs,
            out_specs=pl.BlockSpec((tm, N), lambda i: (i, 0)),
        ),
        compiler_params=pltpu.CompilerParams(
            dimension_semantics=("parallel",)),
    )(*args)


def _lstm_stack_kernel(gx0_ref, h0_ref, c0_ref, *rest,
                       seq_len, hidden_dim, num_layers):
    """Whole LSTM stack, whole sequence, one kernel invocation.

    gx0_ref:          (T, Bs, 4H) f32  hoisted layer-0 gates x@Wih0 + b0
                                       (gate order (i, f, g, o) along 4H)
    h0_ref / c0_ref:  (L, Bs, H)  f32
    rest = [whh_0..whh_{L-1}]                         (H, 4H) bf16
         + [wih_1, b_1, ..., wih_{L-1}, b_{L-1}]      (H, 4H) bf16 / (1, 4H) f32
         + [hseq_out (T,Bs,H), hfin (L,Bs,H), cfin (L,Bs,H)]  f32 outputs
         + [xbuf (T,Bs,H), gbuf (T,Bs,4H)]            f32 VMEM scratch
    """
    T, H, L = seq_len, hidden_dim, num_layers
    whh_refs = rest[:L]
    wb_refs = rest[L:L + 2 * (L - 1)]
    hseq_ref, hfin_ref, cfin_ref, xbuf_ref, gbuf_ref = rest[L + 2 * (L - 1):]
    Bs = gx0_ref.shape[1]

    def gate_math(z, c):
        # Full-128-lane EUP passes (one sigmoid + one tanh) + a single iota
        # select for the "g" band, instead of four sliced 32-lane activations
        # on the serial critical path.
        sig = jax.nn.sigmoid(z)
        tnh = jnp.tanh(z)
        lane = jax.lax.broadcasted_iota(jnp.int32, z.shape, 1)
        g_band = (lane >= 2 * H) & (lane < 3 * H)
        a = jnp.where(g_band, tnh, sig)
        i = a[:, 0 * H:1 * H]
        f = a[:, 1 * H:2 * H]
        g = a[:, 2 * H:3 * H]
        o = a[:, 3 * H:4 * H]
        c_new = f * c + i * g
        h_new = o * jnp.tanh(c_new)
        return h_new, c_new

    for layer in range(L):
        whh = whh_refs[layer][...]        # loaded once per layer (time-stationary)
        # TODO(synk): pltpu.matmul_push_rhs/acc_lhs/pop could keep Whh in the
        # MXU weight registers across all T steps; left as a follow-up.
        if layer == 0:
            gates_ref = gx0_ref
        else:
            # Hoisted input projection for this layer: ONE (T*Bs, H) @ (H, 4H)
            # MXU matmul over VMEM-resident data, off the serial path.
            wih = wb_refs[2 * (layer - 1)][...]
            bias = wb_refs[2 * (layer - 1) + 1][...]
            x_prev = xbuf_ref[...]                                  # (T, Bs, H)
            gx = jnp.dot(x_prev.reshape(T * Bs, H).astype(jnp.bfloat16), wih,
                         preferred_element_type=jnp.float32) + bias
            gbuf_ref[...] = gx.reshape(T, Bs, 4 * H)
            gates_ref = gbuf_ref
        target_ref = hseq_ref if layer == L - 1 else xbuf_ref

        def step(t, carry, gates_ref=gates_ref, target_ref=target_ref, whh=whh):
            h, c = carry
            z = gates_ref[t] + jnp.dot(h.astype(jnp.bfloat16), whh,
                                       preferred_element_type=jnp.float32)
            h_new, c_new = gate_math(z, c)
            target_ref[t] = h_new
            return h_new, c_new

        h_fin, c_fin = jax.lax.fori_loop(
            0, T, step, (h0_ref[layer], c0_ref[layer]))
        hfin_ref[layer] = h_fin
        cfin_ref[layer] = c_fin


def lstm_stack_pallas(gx0, h0_all, c0_all, whh_list, wih_rest, b_rest,
                      hidden_dim):
    """gx0: (T, B, 4H) f32 -> (hseq (T,B,H) f32, h_T (L,B,H) f32, c_T (L,B,H) f32)."""
    T, B, _ = gx0.shape
    L = h0_all.shape[0]
    H = hidden_dim
    # v7x dual-TensorCore: shard the batch over a "parallel" grid axis whenever
    # each shard keeps >= 8 sublane rows; otherwise run a single program.
    nsh = 2 if B % 16 == 0 else 1
    Bs = B // nsh

    # After the x@Wih hoist the kernel footprint is independent of the CNN
    # feature width D; sanity-check residency against v7x's VMEM.
    est_bytes = 4 * (2 * (2 * T * Bs * 4 * H + 2 * T * Bs * H + 6 * L * Bs * H)
                     + 2 * L * H * 4 * H)
    assert est_bytes < 24 * 1024 * 1024, (
        "LSTM stack VMEM residency too large for this (T, B); chunk T with "
        "BlockSpecs / pltpu.emit_pipeline before running at this size.")
    # TODO(synk): for very long T, chunk gx0/hseq over time with BlockSpecs or
    # pltpu.emit_pipeline instead of full VMEM residency.

    kern = functools.partial(_lstm_stack_kernel, seq_len=T, hidden_dim=H,
                             num_layers=L)
    args = [gx0, h0_all, c0_all]
    in_specs = [pl.BlockSpec((T, Bs, 4 * H), lambda s: (0, s, 0)),
                pl.BlockSpec((L, Bs, H), lambda s: (0, s, 0)),
                pl.BlockSpec((L, Bs, H), lambda s: (0, s, 0))]
    for whh in whh_list:
        args.append(whh.astype(jnp.bfloat16))
        in_specs.append(pl.BlockSpec((H, 4 * H), lambda s: (0, 0)))
    for wih, bb in zip(wih_rest, b_rest):
        args.append(wih.astype(jnp.bfloat16))
        in_specs.append(pl.BlockSpec((H, 4 * H), lambda s: (0, 0)))
        args.append(bb.reshape(1, 4 * H).astype(jnp.float32))
        in_specs.append(pl.BlockSpec((1, 4 * H), lambda s: (0, 0)))

    return pl.pallas_call(
        kern,
        out_shape=(jax.ShapeDtypeStruct((T, B, H), jnp.float32),
                   jax.ShapeDtypeStruct((L, B, H), jnp.float32),
                   jax.ShapeDtypeStruct((L, B, H), jnp.float32)),
        grid_spec=pltpu.PrefetchScalarGridSpec(
            num_scalar_prefetch=0,
            grid=(nsh,),
            in_specs=in_specs,
            out_specs=(pl.BlockSpec((T, Bs, H), lambda s: (0, s, 0)),
                       pl.BlockSpec((L, Bs, H), lambda s: (0, s, 0)),
                       pl.BlockSpec((L, Bs, H), lambda s: (0, s, 0))),
            scratch_shapes=[pltpu.VMEM((T, Bs, H), jnp.float32),
                            pltpu.VMEM((T, Bs, 4 * H), jnp.float32)],
        ),
        compiler_params=pltpu.CompilerParams(
            dimension_semantics=("parallel",)),
    )(*args)


# ----------------------------------------------------------------------------
# Glue: transposed im2col (layout plumbing; the matmul is in Pallas)
# ----------------------------------------------------------------------------
def im2col_cnhw_T(x_cnhw, k, s):
    """x: (C, N, H, W) channel-major -> transposed patch matrix
    (C*k*k, N*OH*OW); rows ordered (C, kH, kW) to match torch Conv2d
    weight.reshape(out_c, in_c*k*k); columns ordered (n, oh, ow)."""
    C, N, H, W = x_cnhw.shape
    OH = (H - k) // s + 1
    OW = (W - k) // s + 1
    cols = []
    for di in range(k):
        for dj in range(k):
            cols.append(x_cnhw[:, :, di:di + s * (OH - 1) + 1:s,
                               dj:dj + s * (OW - 1) + 1:s])   # (C, N, OH, OW)
    p = jnp.stack(cols, axis=1)                                # (C, k*k, N, OH, OW)
    return p.reshape(C * k * k, N * OH * OW), OH, OW
# TODO(synk): the patch matrix is still materialized in HBM (bf16); a fully
# in-kernel patch assembly (pl.ANY input + strided pl.ds loads) would remove
# the remaining read/write amplification on the memory-bound conv stage.


# ----------------------------------------------------------------------------
# Model: parameters + forward
# ----------------------------------------------------------------------------
def conv_out_size(n, k, s):
    return (n - k) // s + 1


def init_params(key, float_inputs_dim, img_hw, lstm_hidden_dim,
                lstm_num_layers, mlp_hidden_dims, n_actions):
    H, W = img_hw
    oh1, ow1 = conv_out_size(H, 5, 2), conv_out_size(W, 5, 2)
    oh2, ow2 = conv_out_size(oh1, 5, 2), conv_out_size(ow1, 5, 2)
    cnn_out_dim = 32 * oh2 * ow2
    lstm_input_dim = cnn_out_dim + float_inputs_dim

    keys = iter(jax.random.split(key, 64))

    def u(shape, scale):
        return jax.random.uniform(next(keys), shape, jnp.float32, -scale, scale)

    p = {}
    # conv weights stored as (out_c, in_c*k*k) == torch weight.reshape(out_c, -1)
    s1 = 1.0 / (1 * 5 * 5) ** 0.5
    p["conv1_w"] = u((16, 1, 5, 5), s1).reshape(16, -1)
    p["conv1_b"] = u((16,), s1)
    s2 = 1.0 / (16 * 5 * 5) ** 0.5
    p["conv2_w"] = u((32, 16, 5, 5), s2).reshape(32, -1)
    p["conv2_b"] = u((32,), s2)

    # float input normalization buffers
    p["f_mean"] = jax.random.normal(next(keys), (float_inputs_dim,), jnp.float32)
    p["f_std"] = jnp.abs(jax.random.normal(next(keys), (float_inputs_dim,),
                                           jnp.float32)) + 0.5

    # LSTM: per layer, fused gate weights — (D_in, 4H) / (H, 4H) / (1, 4H),
    # gate order (i, f, g, o) along the 4H axis (PyTorch convention);
    # bias is b_ih + b_hh combined.
    sl = 1.0 / lstm_hidden_dim ** 0.5
    p["lstm"] = []
    d_in = lstm_input_dim
    for _ in range(lstm_num_layers):
        wih = u((d_in, 4 * lstm_hidden_dim), sl)
        whh = u((lstm_hidden_dim, 4 * lstm_hidden_dim), sl)
        b = (u((1, 4 * lstm_hidden_dim), sl)
             + u((1, 4 * lstm_hidden_dim), sl))
        p["lstm"].append((wih, whh, b))
        d_in = lstm_hidden_dim

    # MLP (ReLU activation, the module default)
    p["mlp"] = []
    d = lstm_hidden_dim
    for h in mlp_hidden_dims:
        sm = 1.0 / d ** 0.5
        p["mlp"].append((u((d, h), sm), u((h,), sm), "relu"))
        d = h
    sm = 1.0 / d ** 0.5
    p["mlp"].append((u((d, n_actions), sm), u((n_actions,), sm), None))

    p["dims"] = dict(cnn_out_dim=cnn_out_dim, lstm_input_dim=lstm_input_dim,
                     lstm_hidden_dim=lstm_hidden_dim,
                     lstm_num_layers=lstm_num_layers, n_actions=n_actions)
    return p


def lstm_agent_forward(params, img_seq, float_inputs_seq, hidden=None):
    """img_seq: (B, T, 1, H, W) f32; float_inputs_seq: (B, T, F) f32.
    Returns (q_values (B, T, n_actions) f32, (h_n, c_n) each (L, B, H) f32)."""
    dims = params["dims"]
    B, T, C, Hh, Ww = img_seq.shape
    assert C == 1
    BT = B * T

    # ---- CNN head: transposed im2col + lane-dense Pallas matmul+bias+ReLU ----
    x_cnhw = (img_seq.reshape(BT, C, Hh, Ww)
                     .transpose(1, 0, 2, 3)
                     .astype(jnp.bfloat16))                      # (1, BT, H, W)
    p1t, oh1, ow1 = im2col_cnhw_T(x_cnhw, 5, 2)                  # (25, BT*oh1*ow1)
    y1t = linear_t_pallas(p1t, params["conv1_w"].astype(jnp.bfloat16),
                          params["conv1_b"], act="relu",
                          out_dtype=jnp.bfloat16)                # (16, M1)
    y1 = y1t.reshape(16, BT, oh1, ow1)                           # channel-major

    p2t, oh2, ow2 = im2col_cnhw_T(y1, 5, 2)                      # (400, BT*oh2*ow2)
    y2t = linear_t_pallas(p2t, params["conv2_w"].astype(jnp.bfloat16),
                          params["conv2_b"], act="relu",
                          out_dtype=jnp.bfloat16)                # (32, M2)
    # channel-major result makes the NCHW flatten a cheap re-ordering
    img_feat = (y2t.reshape(32, BT, oh2 * ow2)
                   .transpose(1, 0, 2)
                   .reshape(B, T, dims["cnn_out_dim"]))

    # ---- float input normalization (f32 math, bf16 feed) ----
    f_norm = ((float_inputs_seq - params["f_mean"])
              / (params["f_std"] + 1e-8)).astype(jnp.bfloat16)
    features = jnp.concatenate([img_feat, f_norm], axis=-1)       # (B, T, D)

    # ---- LSTM (all layers fused in one Pallas call) ----
    L = dims["lstm_num_layers"]
    Hd = dims["lstm_hidden_dim"]
    D = dims["lstm_input_dim"]
    if hidden is None:
        h0_all = jnp.zeros((L, B, Hd), jnp.float32)
        c0_all = jnp.zeros((L, B, Hd), jnp.float32)
    else:
        h0_all, c0_all = hidden

    # Hoisted layer-0 input projection: one big MXU matmul, off the serial path.
    wih0 = params["lstm"][0][0]
    b0 = params["lstm"][0][2]
    feats_tbd = features.transpose(1, 0, 2)                       # (T, B, D)
    gx0 = linear_pallas(feats_tbd.reshape(T * B, D),
                        wih0.astype(jnp.bfloat16), b0.reshape(-1),
                        act=None, out_dtype=jnp.float32)
    gx0 = gx0.reshape(T, B, 4 * Hd)

    whh_list = [params["lstm"][layer][1] for layer in range(L)]
    wih_rest = [params["lstm"][layer][0] for layer in range(1, L)]
    b_rest = [params["lstm"][layer][2] for layer in range(1, L)]
    hseq, h_n, c_n = lstm_stack_pallas(gx0, h0_all, c0_all,
                                       whh_list, wih_rest, b_rest, Hd)
    lstm_out = hseq.transpose(1, 0, 2)                             # (B, T, H)

    # ---- MLP head (single fused Pallas kernel) ----
    z = lstm_out.reshape(B * T, Hd).astype(jnp.bfloat16)
    mlp_layers = [(w.astype(jnp.bfloat16), bb, act)
                  for (w, bb, act) in params["mlp"]]
    q = mlp_pallas(z, mlp_layers)
    q_values = q.reshape(B, T, dims["n_actions"])

    return q_values, (h_n, c_n)


# TODO(synk): nn.Dropout is identity in this configuration (p=0.0 / eval), so
# it is omitted rather than faked with a masked kernel.
# NOTE: throughput requirement — batch rollouts at the caller so B is a
# multiple of 8 (f32) / 16 (bf16); with B=2, H=32 every LSTM-step matmul and
# store uses <4% of a vreg and <2% of an MXU tile, and no in-kernel change can
# recover that.  B a multiple of 16 additionally enables v7x batch-shard
# dual-core execution of the LSTM kernel.

# ----------------------------------------------------------------------------
if __name__ == "__main__":
    # Small, module-consistent shapes
    BATCH, SEQ = 2, 8
    IMG_H = IMG_W = 16
    FLOAT_DIM = 8
    LSTM_HIDDEN = 32
    LSTM_LAYERS = 2
    MLP_HIDDEN = (64,)
    N_ACTIONS = 5

    key = jax.random.PRNGKey(0)
    k_img, k_flt, k_par = jax.random.split(key, 3)

    img_seq = jax.random.normal(k_img, (BATCH, SEQ, 1, IMG_H, IMG_W), jnp.float32)
    float_inputs_seq = jax.random.normal(k_flt, (BATCH, SEQ, FLOAT_DIM),
                                         jnp.float32)

    params = init_params(k_par, FLOAT_DIM, (IMG_H, IMG_W), LSTM_HIDDEN,
                         LSTM_LAYERS, MLP_HIDDEN, N_ACTIONS)

    q, (h_n, c_n) = lstm_agent_forward(params, img_seq, float_inputs_seq)
    q = jax.block_until_ready(q)
    h_n = jax.block_until_ready(h_n)
    c_n = jax.block_until_ready(c_n)

    assert q.shape == (BATCH, SEQ, N_ACTIONS)
    assert h_n.shape == (LSTM_LAYERS, BATCH, LSTM_HIDDEN)
    assert c_n.shape == (LSTM_LAYERS, BATCH, LSTM_HIDDEN)
    assert bool(jnp.all(jnp.isfinite(q)))
    assert bool(jnp.all(jnp.isfinite(h_n))) and bool(jnp.all(jnp.isfinite(c_n)))

    print("KERNEL_OK")
</pallas_src>

<mosaic_0001>
module attributes {stable_mosaic.version = 11 : i64} {
  func.func @_linear_t_kernel(%arg0: i32, %arg1: memref<25x576xbf16, #tpu.memory_space<vmem>>, %arg2: memref<16x25xbf16, #tpu.memory_space<vmem>>, %arg3: memref<16x1xf32, #tpu.memory_space<vmem>>, %arg4: memref<16x576xbf16, #tpu.memory_space<vmem>>) attributes {dimension_semantics = [#tpu.dimension_semantics<parallel>], iteration_bounds = array<i64: 1>, scalar_prefetch = 0 : i64, scratch_operands = 0 : i64, tpu.core_type = #tpu.core_type<tc>, window_params = [{transform_indices = @transform_0, window_bounds = array<i64: 25, 576>}, {pipeline_mode = #tpu.pipeline_mode<synchronous>, transform_indices = @transform_1, window_bounds = array<i64: 16, 25>}, {pipeline_mode = #tpu.pipeline_mode<synchronous>, transform_indices = @transform_2, window_bounds = array<i64: 16, 1>}, {transform_indices = @transform_3, window_bounds = array<i64: 16, 576>}]} {
    %c0 = arith.constant 0 : index
    %c0_0 = arith.constant 0 : index
    %0 = vector.load %arg2[%c0, %c0_0] : memref<16x25xbf16, #tpu.memory_space<vmem>>, vector<16x25xbf16>
    %c0_1 = arith.constant 0 : index
    %c0_2 = arith.constant 0 : index
    %1 = vector.load %arg1[%c0_1, %c0_2] : memref<25x576xbf16, #tpu.memory_space<vmem>>, vector<25x576xbf16>
    %cst = arith.constant dense<0.000000e+00> : vector<16x576xf32>
    %2 = tpu.matmul %0, %1, %cst {dimension_numbers = #tpu.dot_dimension_numbers<[1], [0], [0], [1], [0, 0, 1, 1], [], []>} : vector<16x25xbf16>, vector<25x576xbf16>, vector<16x576xf32> -> vector<16x576xf32>
    %c0_3 = arith.constant 0 : index
    %c0_4 = arith.constant 0 : index
    %3 = vector.load %arg3[%c0_3, %c0_4] : memref<16x1xf32, #tpu.memory_space<vmem>>, vector<16x1xf32>
    %4 = vector.broadcast %3 : vector<16x1xf32> to vector<16x576xf32>
    %5 = arith.addf %2, %4 : vector<16x576xf32>
    %cst_5 = arith.constant 0.000000e+00 : f32
    %6 = vector.broadcast %cst_5 : f32 to vector<16x576xf32>
    %7 = arith.maximumf %5, %6 : vector<16x576xf32>
    %8 = arith.truncf %7 : vector<16x576xf32> to vector<16x576xbf16>
    %c0_6 = arith.constant 0 : index
    %c0_7 = arith.constant 0 : index
    %9 = vector.load %arg4[%c0_6, %c0_7] : memref<16x576xbf16, #tpu.memory_space<vmem>>, vector<16x576xbf16>
    tpu.vector_store %arg4[%c0_6, %c0_7], %8 {strides = array<i32>} : memref<16x576xbf16, #tpu.memory_space<vmem>>, vector<16x576xbf16>,
    return
  }
  func.func @transform_0(%arg0: i32) -> (i32, i32) {
    %c0_i32 = arith.constant 0 : i32
    %c0_i32_0 = arith.constant 0 : i32
    return %c0_i32, %arg0 : i32, i32
  }
  func.func @transform_1(%arg0: i32) -> (i32, i32) {
    %c0_i32 = arith.constant 0 : i32
    %c0_i32_0 = arith.constant 0 : i32
    %c0_i32_1 = arith.constant 0 : i32
    return %c0_i32, %c0_i32_0 : i32, i32
  }
  func.func @transform_2(%arg0: i32) -> (i32, i32) {
    %c0_i32 = arith.constant 0 : i32
    %c0_i32_0 = arith.constant 0 : i32
    %c0_i32_1 = arith.constant 0 : i32
    return %c0_i32, %c0_i32_0 : i32, i32
  }
  func.func @transform_3(%arg0: i32) -> (i32, i32) {
    %c0_i32 = arith.constant 0 : i32
    %c0_i32_0 = arith.constant 0 : i32
    return %c0_i32, %arg0 : i32, i32
  }
}

</mosaic_0001>

<llo_original>
// kernel: tpu_custom_call.1
$region0: #{tpu_custom_call.1}
  #allocation0 [shape = 'u32[]', space=smem, size = 0x4, offset = 0x4, fixed_abs, tag = 'smem constant byte address 0x4 - core index']
  #allocation1 [shape = 'u32[144,128]{1,0:T(1,128)}', space=vmem, size = 0x12000, scoped, tag = 'internal scratch']
  %s0 = inlined_call_operand.hbm [shape: bf16[25,576], index: 0, kind: input, shape index: {}]
  %s1 = inlined_call_operand.vmem [shape: bf16[16,25], index: 1, kind: input, shape index: {}]
  %s2 = inlined_call_operand.vmem [shape: f32[16,1], index: 2, kind: input, shape index: {}]
  %s3 = inlined_call_operand.hbm [shape: bf16[16,576], index: 3, kind: output, shape index: {}]
  %s4 = sld [smem:[#allocation0]]
  $region26: #{tpu_custom_call.1} parent=0
    _
  %s6 = ssub.s32 1, %s4
  %s7 = scalar_select 0, %s6, %s4
  $region1: #{tpu_custom_call.1} parent=0
    #allocation2 [shape = 'u8[40960]{0}', space=vmem, size = 0xa000, scoped, tag = 'input window, operand 0, single buffered']
    #allocation3 [shape = 's32[1]{0}', space=sflag, size = 0x4, scoped, tag = 'scoped memory for tpu_custom_call.1']
    #allocation4 [shape = 's32[1]{0}', space=sflag, size = 0x4, scoped, tag = 'scoped memory for tpu_custom_call.1']
    #allocation5 [shape = 'u8[20480]{0}', space=vmem, size = 0x5000, scoped, tag = 'output window, operand 0, single buffered']
    %8 = vsyncpa [#allocation3], 0
    %9 = vsyncpa [#allocation4], 0
    // Predicated region
    $region2: #{tpu_custom_call.1} parent=1 // pred_check
      _
    $region3: #{tpu_custom_call.1} parent=1 // pred_check_branch
      %11 = sbr.rel (0) target = $region5
    $region4: #{tpu_custom_call.1} parent=1 // pred_region
      %s13 = ssub.s32 1280, 1280
      %14 = vsyncadd [#allocation3], %s13
      %s15 = sshll.u32 [#allocation2], 4
      %s16 = int_to_ptr.vmem [resolvable:$true] %s15
      %21 = dma.hbm_to_vmem [thread:$0]  %s0, 1280, %s16, [#allocation3], 320, 320, 20
    $region5: #{tpu_custom_call.1} parent=1 // pred_fallthru
      _
    // Predicated region
    $region6: #{tpu_custom_call.1} parent=1 // pred_check
      _
    $region7: #{tpu_custom_call.1} parent=1 // pred_check_branch
      %23 = sbr.rel (0) target = $region9
    $region8: #{tpu_custom_call.1} parent=1 // pred_region
      _
    $region9: #{tpu_custom_call.1} parent=1 // pred_fallthru
      _
    // Predicated region
    $region10: #{tpu_custom_call.1} parent=1 // pred_check
      _
    $region11: #{tpu_custom_call.1} parent=1 // pred_check_branch
      %25 = sbr.rel (0) target = $region13
    $region12: #{tpu_custom_call.1} parent=1 // pred_region
      _
    $region13: #{tpu_custom_call.1} parent=1 // pred_fallthru
      _
    // Predicated region
    $region14: #{tpu_custom_call.1} parent=1 // pred_check
      _
    $region15: #{tpu_custom_call.1} parent=1 // pred_check_branch
      %27 = sbr.rel (0) target = $region17
    $region16: #{tpu_custom_call.1} parent=1 // pred_region
      %28 = dma.done [#allocation3], 1280
    $region17: #{tpu_custom_call.1} parent=1 // pred_fallthru
      _
    %v30 = vld [vmem:[%s1] sm:$0xf]
    %v31 = vld [vmem:[%s1 + $0x4] sm:$0xf]
    %v32 = vld [vmem:[#allocation2] sm:$0xff]
    %v33 = vld [vmem:[#allocation2 + $0x8] sm:$0xff]
    %v34 = vld [vmem:[#allocation2 + $0x10] sm:$0xf]
    %v35 = vld [vmem:[#allocation2 + $0x14] sm:$0xff]
    %v36 = vld [vmem:[#allocation2 + $0x1c] sm:$0xff]
    %v37 = vld [vmem:[#allocation2 + $0x24] sm:$0xf]
    %v38 = vld [vmem:[#allocation2 + $0x28] sm:$0xff]
    %v39 = vld [vmem:[#allocation2 + $0x30] sm:$0xff]
    %v40 = vld [vmem:[#allocation2 + $0x38] sm:$0xf]
    %v41 = vld [vmem:[#allocation2 + $0x3c] sm:$0x11]
    %v42 = vld [vmem:[#allocation2 + $0x44] sm:$0x11]
    %v43 = vld [vmem:[#allocation2 + $0x4c] sm:$0x1]
    %v44 = vld [vmem:[%s2] sm:$0xff]
    %v45 = vld [vmem:[%s2 + $0x8] sm:$0xff]
    %47 = vset.pattern.permute.xlu0 0
    %48 = vperm.xlu0 %47, %v44
    %v49 = vpop.permute.xlu0 %48
    %52 = vset.pattern.permute.xlu0 0
    %53 = vperm.xlu0 %52, %v45
    %v54 = vpop.permute.xlu0 %53
    %v58 = vunpack.c.l.b16 %v30
    %v59 = vunpack.c.l.b16 %v31
    %v60 = vpack.c.b16 %v59, %v58
    %v73 = vunpack.c.l.b16 %v32
    %v74 = vunpack.c.h.b16 %v32
    %v75 = vunpack.c.l.b16 %v33
    %v76 = vunpack.c.h.b16 %v33
    %v77 = vunpack.c.l.b16 %v34
    %v78 = vunpack.c.l.b16 %v35
    %v79 = vunpack.c.h.b16 %v35
    %v80 = vunpack.c.l.b16 %v36
    %v81 = vunpack.c.h.b16 %v36
    %v82 = vunpack.c.l.b16 %v37
    %v83 = vunpack.c.l.b16 %v38
    %v84 = vunpack.c.h.b16 %v38
    %v85 = vunpack.c.l.b16 %v39
    %v86 = vunpack.c.h.b16 %v39
    %v87 = vunpack.c.l.b16 %v40
    %v88 = vunpack.c.l.b16 %v41
    %v89 = vunpack.c.h.b16 %v41
    %v90 = vunpack.c.l.b16 %v42
    %v91 = vunpack.c.h.b16 %v42
    %v92 = vunpack.c.l.b16 %v43
    %v93 = vpack.c.b16 %v78, %v73
    %v94 = vpack.c.b16 %v79, %v74
    %v95 = vpack.c.b16 %v80, %v75
    %v96 = vpack.c.b16 %v81, %v76
    %v97 = vpack.c.b16 %v82, %v77
    %v98 = vpack.c.b16 %v88, %v83
    %v99 = vpack.c.b16 %v89, %v84
    %v100 = vpack.c.b16 %v90, %v85
    %v101 = vpack.c.b16 %v91, %v86
    %v102 = vpack.c.b16 %v92, %v87
    %vm108 = vcmask 203776
    %v110 = vsel %vm108, %v60, 0
    %vm112 = vcmask 1043456
    %vm113 = vcmask 1044480
    %v114 = vsel %vm112, 4294967295, 65535
    %v115 = vsel %vm113, %v114, 0
    %v117 = vand.u32 %v98, %v115
    %v120 = vand.u32 %v99, %v115
    %v123 = vand.u32 %v100, %v115
    %v126 = vand.u32 %v101, %v115
    %v129 = vand.u32 %v102, %v115
    %131 = vmatprep.subr.bf16.mxu0 %v94
    %132 = vmatpush1.bf16.msra.mxu0 %v93
    %133 = vmatprep.subr.bf16.mxu0 %v120
    %134 = vmatpush1.bf16.msra.mxu0 %v117
    %135 = vmatprep.subr.bf16.mxu0 0
    %136 = vmatpush1.bf16.msra.mxu0 0
    %137 = vmatprep.subr.bf16.mxu0 0
    %138 = vmatpush1.bf16.msra.mxu0 0
    %139 = vmatprep.subr.bf16.mxu0 0
    %140 = vmatpush1.bf16.msra.mxu0 0
    %141 = vmatprep.subr.bf16.mxu0 0
    %142 = vmatpush1.bf16.msra.mxu0 0
    %143 = vmatprep.subr.bf16.mxu0 0
    %144 = vmatpush1.bf16.msra.mxu0 0
    %145 = vmatprep.subr.bf16.mxu0 0
    %146 = vmatpush1.bf16.msra.mxu0 0
    %147 = vmatprep.subr.bf16.mxu0 0
    %148 = vmatpush1.bf16.msra.mxu0 0
    %149 = vmatprep.subr.bf16.mxu0 0
    %150 = vmatpush1.bf16.msra.mxu0 0
    %151 = vmatprep.subr.bf16.mxu0 0
    %152 = vmatpush1.bf16.msra.mxu0 0
    %153 = vmatprep.subr.bf16.mxu0 0
    %154 = vmatpush1.bf16.msra.mxu0 0
    %155 = vmatprep.subr.bf16.mxu0 0
    %156 = vmatpush1.bf16.msra.mxu0 0
    %157 = vmatprep.subr.bf16.mxu0 0
    %158 = vmatpush1.bf16.msra.mxu0 0
    %159 = vmatprep.subr.bf16.mxu0 0
    %160 = vmatpush1.bf16.msra.mxu0 0
    %161 = vmatprep.subr.bf16.mxu0 0
    %162 = vmatpush1.bf16.msra.mxu0 0
    %163 = vmatprep.mubr.bf16.mxu0 0
    %164 = vmatmul.mubr.bf16.gmra.mrb[0].mxu0 %v110
    %v165 = vpop.f32.mrb[0].mxu0
    %v166 = vadd.f32 %v49, %v165
    %v167 = vpop.f32.mrb[0].mxu0
    %v168 = vadd.f32 %v49, %v167
    %v169 = vpop.f32.mrb[0].mxu0
    %v170 = vadd.f32 %v54, %v169
    %v171 = vpop.f32.mrb[0].mxu0
    %v172 = vadd.f32 %v54, %v171
    %173 = vdwg.mxu0
    %174 = vmatprep.subr.bf16.mxu0 %v96
    %175 = vmatpush1.bf16.msra.mxu0 %v95
    %176 = vmatprep.subr.bf16.mxu0 %v126
    %177 = vmatpush1.bf16.msra.mxu0 %v123
    %178 = vmatprep.subr.bf16.mxu0 0
    %179 = vmatpush1.bf16.msra.mxu0 0
    %180 = vmatprep.subr.bf16.mxu0 0
    %181 = vmatpush1.bf16.msra.mxu0 0
    %182 = vmatprep.subr.bf16.mxu0 0
    %183 = vmatpush1.bf16.msra.mxu0 0
    %184 = vmatprep.subr.bf16.mxu0 0
    %185 = vmatpush1.bf16.msra.mxu0 0
    %186 = vmatprep.subr.bf16.mxu0 0
    %187 = vmatpush1.bf16.msra.mxu0 0
    %188 = vmatprep.subr.bf16.mxu0 0
    %189 = vmatpush1.bf16.msra.mxu0 0
    %190 = vmatprep.subr.bf16.mxu0 0
    %191 = vmatpush1.bf16.msra.mxu0 0
    %192 = vmatprep.subr.bf16.mxu0 0
    %193 = vmatpush1.bf16.msra.mxu0 0
    %194 = vmatprep.subr.bf16.mxu0 0
    %195 = vmatpush1.bf16.msra.mxu0 0
    %196 = vmatprep.subr.bf16.mxu0 0
    %197 = vmatpush1.bf16.msra.mxu0 0
    %198 = vmatprep.subr.bf16.mxu0 0
    %199 = vmatpush1.bf16.msra.mxu0 0
    %200 = vmatprep.subr.bf16.mxu0 0
    %201 = vmatpush1.bf16.msra.mxu0 0
    %202 = vmatprep.subr.bf16.mxu0 0
    %203 = vmatpush1.bf16.msra.mxu0 0
    %204 = vmatprep.subr.bf16.mxu0 0
    %205 = vmatpush1.bf16.msra.mxu0 0
    %206 = vmatprep.mubr.bf16.mxu0 0
    %207 = vmatmul.mubr.bf16.gmra.mrb[0].mxu0 %v110
    %v208 = vpop.f32.mrb[0].mxu0
    %v209 = vadd.f32 %v49, %v208
    %v210 = vpop.f32.mrb[0].mxu0
    %v211 = vadd.f32 %v49, %v210
    %v212 = vpop.f32.mrb[0].mxu0
    %v213 = vadd.f32 %v54, %v212
    %v214 = vpop.f32.mrb[0].mxu0
    %v215 = vadd.f32 %v54, %v214
    %216 = vdwg.mxu0
    %217 = vmatprep.subr.bf16.mxu0 0
    %218 = vmatpush1.bf16.msra.mxu0 %v97
    %219 = vmatprep.subr.bf16.mxu0 0
    %220 = vmatpush1.bf16.msra.mxu0 %v129
    %221 = vmatprep.subr.bf16.mxu0 0
    %222 = vmatpush1.bf16.msra.mxu0 0
    %223 = vmatprep.subr.bf16.mxu0 0
    %224 = vmatpush1.bf16.msra.mxu0 0
    %225 = vmatprep.subr.bf16.mxu0 0
    %226 = vmatpush1.bf16.msra.mxu0 0
    %227 = vmatprep.subr.bf16.mxu0 0
    %228 = vmatpush1.bf16.msra.mxu0 0
    %229 = vmatprep.subr.bf16.mxu0 0
    %230 = vmatpush1.bf16.msra.mxu0 0
    %231 = vmatprep.subr.bf16.mxu0 0
    %232 = vmatpush1.bf16.msra.mxu0 0
    %233 = vmatprep.subr.bf16.mxu0 0
    %234 = vmatpush1.bf16.msra.mxu0 0
    %235 = vmatprep.subr.bf16.mxu0 0
    %236 = vmatpush1.bf16.msra.mxu0 0
    %237 = vmatprep.subr.bf16.mxu0 0
    %238 = vmatpush1.bf16.msra.mxu0 0
    %239 = vmatprep.subr.bf16.mxu0 0
    %240 = vmatpush1.bf16.msra.mxu0 0
    %241 = vmatprep.subr.bf16.mxu0 0
    %242 = vmatpush1.bf16.msra.mxu0 0
    %243 = vmatprep.subr.bf16.mxu0 0
    %244 = vmatpush1.bf16.msra.mxu0 0
    %245 = vmatprep.subr.bf16.mxu0 0
    %246 = vmatpush1.bf16.msra.mxu0 0
    %247 = vmatprep.subr.bf16.mxu0 0
    %248 = vmatpush1.bf16.msra.mxu0 0
    %249 = vmatprep.mubr.bf16.mxu0 0
    %250 = vmatmul.mubr.bf16.gmra.mrb[0].mxu0 %v110
    %v251 = vpop.f32.mrb[0].mxu0
    %v252 = vadd.f32 %v49, %v251
    %v253 = vpop.f32.mrb[0].mxu0
    %v254 = vpop.f32.mrb[0].mxu0
    %v255 = vadd.f32 %v54, %v254
    %v256 = vpop.f32.mrb[0].mxu0
    %257 = vdwg.mxu0
    %v258 = vmax.f32 %v166, 0.0
    %v259 = vmax.f32 %v168, 0.0
    %v260 = vmax.f32 %v209, 0.0
    %v261 = vmax.f32 %v211, 0.0
    %v262 = vmax.f32 %v252, 0.0
    %v263 = vmax.f32 %v170, 0.0
    %v264 = vmax.f32 %v172, 0.0
    %v265 = vmax.f32 %v213, 0.0
    %v266 = vmax.f32 %v215, 0.0
    %v267 = vmax.f32 %v255, 0.0
    %v268 = vpack.c.bf16 %v263, %v258
    %v269 = vpack.c.bf16 %v264, %v259
    %v270 = vpack.c.bf16 %v265, %v260
    %v271 = vpack.c.bf16 %v266, %v261
    %v272 = vpack.c.bf16 %v267, %v262
    %v278 = vunpack.c.l.b16 %v268
    %v279 = vunpack.c.l.b16 %v269
    %v280 = vunpack.c.l.b16 %v270
    %v281 = vunpack.c.l.b16 %v271
    %v282 = vunpack.c.l.b16 %v272
    %v283 = vunpack.c.h.b16 %v268
    %v284 = vunpack.c.h.b16 %v269
    %v285 = vunpack.c.h.b16 %v270
    %v286 = vunpack.c.h.b16 %v271
    %v287 = vunpack.c.h.b16 %v272
    %v288 = vpack.c.b16 %v279, %v278
    %v289 = vpack.c.b16 %v281, %v280
    %v290 = vpack.c.b16 %v282, %v282
    %v291 = vpack.c.b16 %v284, %v283
    %v292 = vpack.c.b16 %v286, %v285
    %v293 = vpack.c.b16 %v287, %v287
    %300 = vst [vmem:[#allocation5] sm:$0xff] %v288
    %301 = vst [vmem:[#allocation5 + $0x8] sm:$0xff] %v289
    %vm302 = vcmask 519168
    %303 = vst.msk [vmem:[#allocation5 + $0x10] sm:$0xf] %vm302, %v290
    %304 = vst [vmem:[#allocation5 + $0x14] sm:$0xff] %v291
    %305 = vst [vmem:[#allocation5 + $0x1c] sm:$0xff] %v292
    %306 = vst.msk [vmem:[#allocation5 + $0x24] sm:$0xf] %vm302, %v293
    // Predicated region
    $region18: #{tpu_custom_call.1} parent=1 // pred_check
      _
    $region19: #{tpu_custom_call.1} parent=1 // pred_check_branch
      %308 = sbr.rel (0) target = $region21
    $region20: #{tpu_custom_call.1} parent=1 // pred_region
      %s310 = ssub.s32 640, 640
      %311 = vsyncadd [#allocation4], %s310
      %s312 = sshll.u32 [#allocation5], 4
      %s313 = int_to_ptr.vmem [resolvable:$true] %s312
      %318 = dma.vmem_to_hbm [thread:$0]  %s313, 640, %s3, [#allocation4], 320, 320, 20
    $region21: #{tpu_custom_call.1} parent=1 // pred_fallthru
      _
    // Predicated region
    $region22: #{tpu_custom_call.1} parent=1 // pred_check
      _
    $region23: #{tpu_custom_call.1} parent=1 // pred_check_branch
      %320 = sbr.rel (0) target = $region25
    $region24: #{tpu_custom_call.1} parent=1 // pred_region
      %321 = dma.done [#allocation4], 640
    $region25: #{tpu_custom_call.1} parent=1 // pred_fallthru
      _
    %322 = vsyncpa [#allocation3], 1
    %323 = vsyncpa [#allocation4], 1

</llo_original>
